<compile_context>
chip_gen: v6e
topology: v6e:2x2x1
jax: 0.10.0
libtpu: 0.0.40
codegen_flags: <defaults>
</compile_context>

<pallas_src>
import jax
import jax.numpy as jnp
from jax import lax
from jax.experimental import pallas as pl
from jax.experimental.pallas import tpu as pltpu


_LANES = 128
_SUBLANES = 8
_TILE_ROWS = 4096  # (4096, 128) f32 = 2 MiB per buffer; ~8 MiB with 2 inputs x 2 bufs


def mape_pallas(src, tgt, horizon):
    assert src.size == tgt.size and src.size % horizon == 0
    n_elems = src.size

    # Keep native dtype (halves HBM traffic for 16-bit inputs); cast in-kernel.
    s = src.reshape(-1)
    t = tgt.reshape(-1)

    # Lane-dense layout (-1, 128).  Only if n is not a multiple of 128 do we
    # pad the flat tail (one HBM copy); pad uses s == t == 1 so padded
    # elements contribute exactly 0 to the sum.
    if n_elems % _LANES != 0:
        pad = _LANES - n_elems % _LANES
        s = jnp.pad(s, (0, pad), constant_values=1)
        t = jnp.pad(t, (0, pad), constant_values=1)
    rows = s.size // _LANES

    if rows <= _TILE_ROWS:
        # Whole problem fits in one block: single grid step, no pipeline
        # overhead.  Round rows up to a sublane multiple so the in-kernel
        # (-1, 8, 128) fold is exact (tiny pad, contributes 0).
        tile_rows = ((rows + _SUBLANES - 1) // _SUBLANES) * _SUBLANES
        s2 = s.reshape(rows, _LANES)
        t2 = t.reshape(rows, _LANES)
        if tile_rows != rows:
            s2 = jnp.pad(s2, ((0, tile_rows - rows), (0, 0)), constant_values=1)
            t2 = jnp.pad(t2, ((0, tile_rows - rows), (0, 0)), constant_values=1)
        rows = tile_rows
        n_cores, n_steps = 1, 1
        mask_rows = 0  # block == full array, nothing to mask
    else:
        tile_rows = _TILE_ROWS
        n_cores = 2  # "parallel" axis -> both TensorCores on v7x (harmless elsewhere)
        n_steps = -(-rows // (tile_rows * n_cores))
        s2 = s.reshape(rows, _LANES)
        t2 = t.reshape(rows, _LANES)
        # If the grid over-covers the array, overhanging rows of boundary
        # blocks are masked inside the kernel (no HBM padding pass).
        mask_rows = rows if (n_cores * n_steps * tile_rows != rows) else 0

    last_blk = pl.cdiv(rows, tile_rows) - 1  # clamp target for out-of-grid blocks

    def idx_map(c, i):
        return (jnp.minimum(c * n_steps + i, last_blk), 0)

    def kernel(s_ref, t_ref, o_ref):
        c = pl.program_id(0)
        i = pl.program_id(1)

        @pl.when(i == 0)
        def _():
            o_ref[...] = jnp.zeros_like(o_ref)

        sv = s_ref[...].astype(jnp.float32)
        tv = t_ref[...].astype(jnp.float32)
        # TODO(synk): PyTorch semantics apply no eps clamp to |t|; zeros in tgt yield inf/nan.
        e = jnp.abs(sv - tv) / jnp.abs(tv)

        if mask_rows:
            # Zero contributions from rows past the real array extent (covers
            # both the partially-overhanging last block and any clamped
            # duplicate block).
            row0 = (c * n_steps + i) * tile_rows
            rid = row0 + lax.broadcasted_iota(jnp.int32, (tile_rows, 1), 0)
            e = jnp.where(rid < mask_rows, e, 0.0)

        # Fold (tile_rows, 128) onto the vreg-shaped (8, 128) partial with pure
        # elementwise VPU adds — no cross-lane/sublane reduction in the hot loop.
        o_ref[...] += jnp.sum(e.reshape(-1, _SUBLANES, _LANES), axis=0)

    partials = pl.pallas_call(
        kernel,
        out_shape=jax.ShapeDtypeStruct((n_cores * _SUBLANES, _LANES), jnp.float32),
        grid_spec=pltpu.PrefetchScalarGridSpec(
            num_scalar_prefetch=0,
            grid=(n_cores, n_steps),
            in_specs=[
                pl.BlockSpec((tile_rows, _LANES), idx_map),
                pl.BlockSpec((tile_rows, _LANES), idx_map),
            ],
            out_specs=pl.BlockSpec((_SUBLANES, _LANES), lambda c, i: (c, 0)),
        ),
        compiler_params=pltpu.CompilerParams(
            dimension_semantics=("parallel", "arbitrary"),
            vmem_limit_bytes=32 * 1024 * 1024,
        ),
    )(s2, t2)

    # Final tiny cross-lane reduction + scaling in plain JAX.
    return jnp.sum(partials) * (100.0 / n_elems)


def mape_ref(src, tgt, horizon):
    s = src.reshape(-1, horizon).astype(jnp.float32)
    t = tgt.reshape(-1, horizon).astype(jnp.float32)
    up = jnp.abs(s - t)
    down = jnp.abs(t)
    tot = jnp.mean(up / down, axis=-1) * 100.0
    return jnp.mean(tot)


if __name__ == "__main__":
    horizon = 8
    key = jax.random.PRNGKey(0)
    k1, k2, k3, k4, k5, k6, k7, k8 = jax.random.split(key, 8)

    def check(src, tgt, tol):
        out = jax.block_until_ready(mape_pallas(src, tgt, horizon))
        ref = mape_ref(src, tgt, horizon)
        assert jnp.allclose(out, ref, rtol=tol, atol=tol), (out, ref)

    # Small case (single-block path): (4, 4, 8) -> view(-1, 8) = (16, 8).
    src_s = jax.random.normal(k1, (4, 4, horizon), dtype=jnp.float32)
    tgt_s = jnp.abs(jax.random.normal(k2, (4, 4, horizon), dtype=jnp.float32)) + 1.0
    check(src_s, tgt_s, 1e-4)

    # Moderate, lane-aligned case: exercises the zero-copy single big block.
    src_m = jax.random.normal(k3, (512, 128, horizon), dtype=jnp.float32)
    tgt_m = jnp.abs(jax.random.normal(k4, (512, 128, horizon), dtype=jnp.float32)) + 1.0
    check(src_m, tgt_m, 1e-4)

    # Ragged case: lane padding + multi-tile grid + in-kernel row masking of
    # the partially-overhanging boundary block.
    src_r = jax.random.normal(k5, (1023, 65, horizon), dtype=jnp.float32)
    tgt_r = jnp.abs(jax.random.normal(k6, (1023, 65, horizon), dtype=jnp.float32)) + 1.0
    check(src_r, tgt_r, 1e-4)

    # Larger lane-aligned case whose grid over-covers by one block: exercises
    # the clamped-duplicate-block path (fully masked in-kernel).
    src_b = jax.random.normal(k7, (1025, 128, horizon), dtype=jnp.float32)
    tgt_b = jnp.abs(jax.random.normal(k8, (1025, 128, horizon), dtype=jnp.float32)) + 1.0
    check(src_b, tgt_b, 1e-4)

    print("KERNEL_OK")
</pallas_src>

<mosaic_0001>
module attributes {stable_mosaic.version = 11 : i64} {
  func.func @kernel(%arg0: i32, %arg1: i32, %arg2: memref<8x128xf32, #tpu.memory_space<vmem>>, %arg3: memref<8x128xf32, #tpu.memory_space<vmem>>, %arg4: memref<8x128xf32, #tpu.memory_space<vmem>>) attributes {dimension_semantics = [#tpu.dimension_semantics<parallel>, #tpu.dimension_semantics<arbitrary>], iteration_bounds = array<i64: 1, 1>, scalar_prefetch = 0 : i64, scratch_operands = 0 : i64, tpu.core_type = #tpu.core_type<tc>, window_params = [{transform_indices = @transform_0, window_bounds = array<i64: 8, 128>}, {transform_indices = @transform_1, window_bounds = array<i64: 8, 128>}, {transform_indices = @transform_2, window_bounds = array<i64: 8, 128>}]} {
    %c0_i32 = arith.constant 0 : i32
    %0 = arith.cmpi eq, %arg1, %c0_i32 : i32
    %1 = arith.extui %0 : i1 to i32
    %c0_i32_0 = arith.constant 0 : i32
    %2 = arith.cmpi ne, %1, %c0_i32_0 : i32
    scf.if %2 {
      %cst_8 = arith.constant 0.000000e+00 : f32
      %14 = vector.broadcast %cst_8 : f32 to vector<8x128xf32>
      %c0_9 = arith.constant 0 : index
      %c0_10 = arith.constant 0 : index
      %15 = vector.load %arg4[%c0_9, %c0_10] : memref<8x128xf32, #tpu.memory_space<vmem>>, vector<8x128xf32>
      tpu.vector_store %arg4[%c0_9, %c0_10], %14 {strides = array<i32>} : memref<8x128xf32, #tpu.memory_space<vmem>>, vector<8x128xf32>,
    } else {
    }
    %c0 = arith.constant 0 : index
    %c0_1 = arith.constant 0 : index
    %3 = vector.load %arg2[%c0, %c0_1] : memref<8x128xf32, #tpu.memory_space<vmem>>, vector<8x128xf32>
    %c0_2 = arith.constant 0 : index
    %c0_3 = arith.constant 0 : index
    %4 = vector.load %arg3[%c0_2, %c0_3] : memref<8x128xf32, #tpu.memory_space<vmem>>, vector<8x128xf32>
    %5 = arith.subf %3, %4 : vector<8x128xf32>
    %6 = math.absf %5 : vector<8x128xf32>
    %7 = math.absf %4 : vector<8x128xf32>
    %8 = arith.divf %6, %7 : vector<8x128xf32>
    %c0_4 = arith.constant 0 : index
    %c0_5 = arith.constant 0 : index
    %9 = vector.load %arg4[%c0_4, %c0_5] : memref<8x128xf32, #tpu.memory_space<vmem>>, vector<8x128xf32>
    %10 = vector.shape_cast %8 : vector<8x128xf32> to vector<1x8x128xf32>
    %cst = arith.constant dense<0.000000e+00> : vector<8x128xf32>
    %11 = vector.multi_reduction <add>, %10, %cst [0] : vector<1x8x128xf32> to vector<8x128xf32>
    %12 = arith.addf %9, %11 : vector<8x128xf32>
    %c0_6 = arith.constant 0 : index
    %c0_7 = arith.constant 0 : index
    %13 = vector.load %arg4[%c0_6, %c0_7] : memref<8x128xf32, #tpu.memory_space<vmem>>, vector<8x128xf32>
    tpu.vector_store %arg4[%c0_6, %c0_7], %12 {strides = array<i32>} : memref<8x128xf32, #tpu.memory_space<vmem>>, vector<8x128xf32>,
    return
  }
  func.func @transform_0(%arg0: i32, %arg1: i32) -> (i32, i32) {
    %c1_i32 = arith.constant 1 : i32
    %0 = arith.muli %arg0, %c1_i32 : i32
    %1 = arith.addi %0, %arg1 : i32
    %c0_i32 = arith.constant 0 : i32
    %2 = arith.minsi %1, %c0_i32 : i32
    %c0_i32_0 = arith.constant 0 : i32
    %c0_i32_1 = arith.constant 0 : i32
    return %2, %c0_i32_0 : i32, i32
  }
  func.func @transform_1(%arg0: i32, %arg1: i32) -> (i32, i32) {
    %c1_i32 = arith.constant 1 : i32
    %0 = arith.muli %arg0, %c1_i32 : i32
    %1 = arith.addi %0, %arg1 : i32
    %c0_i32 = arith.constant 0 : i32
    %2 = arith.minsi %1, %c0_i32 : i32
    %c0_i32_0 = arith.constant 0 : i32
    %c0_i32_1 = arith.constant 0 : i32
    return %2, %c0_i32_0 : i32, i32
  }
  func.func @transform_2(%arg0: i32, %arg1: i32) -> (i32, i32) {
    %c0_i32 = arith.constant 0 : i32
    %c0_i32_0 = arith.constant 0 : i32
    return %arg0, %c0_i32 : i32, i32
  }
}

</mosaic_0001>

<llo_original>
// kernel: tpu_custom_call.1
$region0: #{tpu_custom_call.1}
  #allocation0 [shape = 'u32[]', space=smem, size = 0x4, offset = 0x4, fixed_abs, tag = 'smem constant byte address 0x4 - core index']
  #allocation1 [shape = 'u32[144,128]{1,0:T(1,128)}', space=vmem, size = 0x12000, scoped, tag = 'internal scratch']
  %s0 = inlined_call_operand.hbm [shape: f32[8,128], index: 0, kind: input, shape index: {}]
  %s1 = inlined_call_operand.hbm [shape: f32[8,128], index: 1, kind: input, shape index: {}]
  %s2 = inlined_call_operand.hbm [shape: f32[8,128], index: 2, kind: output, shape index: {}]
  %s3 = sld [smem:[#allocation0]]
  $region30: #{tpu_custom_call.1} parent=0
    _
  %s5 = ssub.s32 1, %s3
  %s6 = scalar_select 0, %s5, %s3
  $region1: #{tpu_custom_call.1} parent=0
    #allocation2 [shape = 'u8[4096]{0}', space=vmem, size = 0x1000, scoped, tag = 'input window, operand 0, single buffered']
    #allocation3 [shape = 's32[1]{0}', space=sflag, size = 0x4, scoped, tag = 'scoped memory for tpu_custom_call.1']
    #allocation4 [shape = 's32[1]{0}', space=sflag, size = 0x4, scoped, tag = 'scoped memory for tpu_custom_call.1']
    #allocation5 [shape = 'u8[4096]{0}', space=vmem, size = 0x1000, scoped, tag = 'input window, operand 1, single buffered']
    #allocation6 [shape = 's32[1]{0}', space=sflag, size = 0x4, scoped, tag = 'scoped memory for tpu_custom_call.1']
    #allocation7 [shape = 'u8[4096]{0}', space=vmem, size = 0x1000, scoped, tag = 'output window, operand 0, single buffered']
    %7 = vsyncpa [#allocation3], 0
    %8 = vsyncpa [#allocation6], 0
    %9 = vsyncpa [#allocation4], 0
    // Predicated region
    $region2: #{tpu_custom_call.1} parent=1 // pred_check
      _
    $region3: #{tpu_custom_call.1} parent=1 // pred_check_branch
      %11 = sbr.rel (0) target = $region5
    $region4: #{tpu_custom_call.1} parent=1 // pred_region
      %s12 = sadd.s32 0, 0
      %p13 = scmp.lt.s32.totalorder %s12, 0
      %s14 = scalar_select %p13, %s12, 0
      %s16 = ssub.s32 128, 128
      %17 = vsyncadd [#allocation3], %s16
      %s18 = smul.addr %s14, 128
      %s19 = scalar_lea.hbm %s0, %s18
      %s21 = sshll.u32 [#allocation2], 4
      %s22 = int_to_ptr.vmem [resolvable:$true] %s21
      %24 = dma.hbm_to_vmem [thread:$0]  %s19, 128, %s22, [#allocation3]
    $region5: #{tpu_custom_call.1} parent=1 // pred_fallthru
      _
    // Predicated region
    $region6: #{tpu_custom_call.1} parent=1 // pred_check
      _
    $region7: #{tpu_custom_call.1} parent=1 // pred_check_branch
      %26 = sbr.rel (0) target = $region9
    $region8: #{tpu_custom_call.1} parent=1 // pred_region
      %s27 = sadd.s32 0, 0
      %p28 = scmp.lt.s32.totalorder %s27, 0
      %s29 = scalar_select %p28, %s27, 0
      %s31 = ssub.s32 128, 128
      %32 = vsyncadd [#allocation6], %s31
      %s33 = smul.addr %s29, 128
      %s34 = scalar_lea.hbm %s1, %s33
      %s36 = sshll.u32 [#allocation5], 4
      %s37 = int_to_ptr.vmem [resolvable:$true] %s36
      %39 = dma.hbm_to_vmem [thread:$0]  %s34, 128, %s37, [#allocation6]
    $region9: #{tpu_custom_call.1} parent=1 // pred_fallthru
      _
    // Predicated region
    $region10: #{tpu_custom_call.1} parent=1 // pred_check
      _
    $region11: #{tpu_custom_call.1} parent=1 // pred_check_branch
      %41 = sbr.rel (0) target = $region13
    $region12: #{tpu_custom_call.1} parent=1 // pred_region
      %42 = dma.done [#allocation3], 128
    $region13: #{tpu_custom_call.1} parent=1 // pred_fallthru
      _
    // Predicated region
    $region14: #{tpu_custom_call.1} parent=1 // pred_check
      _
    $region15: #{tpu_custom_call.1} parent=1 // pred_check_branch
      %44 = sbr.rel (0) target = $region17
    $region16: #{tpu_custom_call.1} parent=1 // pred_region
      %45 = dma.done [#allocation6], 128
    $region17: #{tpu_custom_call.1} parent=1 // pred_fallthru
      _
    %s46 = sadd.s32 0, 0
    %p47 = scmp.lt.s32.totalorder %s46, 0
    %s48 = scalar_select %p47, %s46, 0
    %s49 = sadd.s32 0, 0
    %p50 = scmp.lt.s32.totalorder %s49, 0
    %s51 = scalar_select %p50, %s49, 0
    %p52 = scmp.eq.s32.totalorder 0, 0
    // Predicated region
    $region18: #{tpu_custom_call.1} parent=1 // pred_check
      %p53 = pneg %p52
    $region19: #{tpu_custom_call.1} parent=1 // pred_check_branch
      %55 = sbr.rel (%p53) target = $region21
    $region20: #{tpu_custom_call.1} parent=1 // pred_region
      %56 = vst [vmem:[#allocation7] sm:$0xff] 0.0
    $region21: #{tpu_custom_call.1} parent=1 // pred_fallthru
      _
    %v57 = vld [vmem:[#allocation2] sm:$0xff]
    %v58 = vld [vmem:[#allocation5] sm:$0xff]
    %v59 = vsub.f32 %v57, %v58
    %v60 = vand.u32 2147483647, %v59
    %v61 = vand.u32 2147483647, %v58
    %v62 = vrcp.pop %v61
    %v63 = vmul.f32 %v60, %v62
    %v64 = vld [vmem:[#allocation7] sm:$0xff]
    %v65 = vadd.f32 %v63, 0.0
    %v66 = vadd.f32 %v64, %v65
    %67 = vst [vmem:[#allocation7] sm:$0xff] %v66
    // Predicated region
    $region22: #{tpu_custom_call.1} parent=1 // pred_check
      _
    $region23: #{tpu_custom_call.1} parent=1 // pred_check_branch
      %69 = sbr.rel (0) target = $region25
    $region24: #{tpu_custom_call.1} parent=1 // pred_region
      %s71 = ssub.s32 128, 128
      %72 = vsyncadd [#allocation4], %s71
      %s74 = sshll.u32 [#allocation7], 4
      %s75 = int_to_ptr.vmem [resolvable:$true] %s74
      %77 = dma.vmem_to_hbm [thread:$0]  %s75, 128, %s2, [#allocation4]
    $region25: #{tpu_custom_call.1} parent=1 // pred_fallthru
      _
    // Predicated region
    $region26: #{tpu_custom_call.1} parent=1 // pred_check
      _
    $region27: #{tpu_custom_call.1} parent=1 // pred_check_branch
      %79 = sbr.rel (0) target = $region29
    $region28: #{tpu_custom_call.1} parent=1 // pred_region
      %80 = dma.done [#allocation4], 128
    $region29: #{tpu_custom_call.1} parent=1 // pred_fallthru
      _
    %81 = vsyncpa [#allocation3], 1
    %82 = vsyncpa [#allocation6], 1
    %83 = vsyncpa [#allocation4], 1

</llo_original>
